<compile_context>
chip_gen: v6e
topology: v6e:2x2x1
jax: 0.10.0
libtpu: 0.0.40
codegen_flags: <defaults>
</compile_context>

<pallas_src>
import jax
import jax.numpy as jnp
from jax.experimental import pallas as pl
from jax.experimental.pallas import tpu as pltpu


def _round_up(n, m):
    return ((n + m - 1) // m) * m


def scorenet_kernel(x_ref, t_ref, w1x_ref, w1t_ref, b1_ref, w2_ref, b2_ref, o_ref):
    # x_ref : [tb, D]  streamed batch tile (unpadded feature dim)
    # t_ref : [tb, 1]  streamed time tile
    # w1x   : [D, H], w1t: [1, H], b1: [1, H]   -- VMEM-resident
    # w2    : [H, D], b2: [1, D]                -- 0.01 scale pre-folded
    h = jnp.dot(x_ref[...], w1x_ref[...], preferred_element_type=jnp.float32)
    h = h + t_ref[...] * w1t_ref[...]          # t-conditioning on the VPU
    h = jnp.maximum(h + b1_ref[...], 0.0)
    out = jnp.dot(h, w2_ref[...], preferred_element_type=jnp.float32)
    o_ref[...] = (out + b2_ref[...]).astype(o_ref.dtype)


def init_params(key, d, h):
    """Raw, PyTorch-Linear-like parameters (fan-in uniform init)."""
    k1, k2, k3, k4, k5 = jax.random.split(key, 5)
    s1 = 1.0 / jnp.sqrt(d + 1.0)   # first layer sees concat([x, t]) -> fan_in = d+1
    s2 = 1.0 / jnp.sqrt(float(h))
    w1x = jax.random.uniform(k1, (d, h), jnp.float32, -s1, s1)
    w1t = jax.random.uniform(k2, (1, h), jnp.float32, -s1, s1)
    b1 = jax.random.uniform(k3, (1, h), jnp.float32, -s1, s1)
    w2 = jax.random.uniform(k4, (h, d), jnp.float32, -s2, s2)
    b2 = jax.random.uniform(k5, (1, d), jnp.float32, -s2, s2)
    return (w1x, w1t, b1, w2, b2)


def prepare_params(params):
    """One-time prep: fold the 0.01 ScoreNet output scale into W2/b2.
    No feature padding — the kernel uses full-extent feature BlockSpecs."""
    w1x, w1t, b1, w2, b2 = params
    return (w1x.astype(jnp.float32),
            w1t.astype(jnp.float32),
            b1.astype(jnp.float32),
            (0.01 * w2).astype(jnp.float32),
            (0.01 * b2).astype(jnp.float32))


def scorenet_forward(t, x, prepared, *, tile_b=1024):
    """0.01 * MLP(t, x), fused in one Pallas kernel with resident weights."""
    w1x, w1t, b1, w2, b2 = prepared
    B, D = x.shape
    H = w1x.shape[1]
    if t.ndim == 1:
        t = t[:, None]
    assert t.shape == (B, 1), f"t must have shape [B,1] or [B], got {t.shape}"
    assert w1x.shape == (D, H) and w1t.shape == (1, H) and b1.shape == (1, H)
    assert w2.shape == (H, D) and b2.shape == (1, D)
    t = t.astype(x.dtype)

    # Batch tile: multiple of 8 sublanes; large by default to amortize the
    # ~0.35 µs per-grid-step overhead, but capped so the grid keeps >=4 steps
    # when the batch allows (lets v7x shard the "parallel" axis over 2 TCs).
    tb = _round_up(min(tile_b, B), 8)
    tb = min(tb, max(8, _round_up(pl.cdiv(_round_up(B, 8), 4), 8)))
    Bp = _round_up(B, tb)
    if Bp != B:
        x = jnp.pad(x, ((0, Bp - B), (0, 0)))
        t = jnp.pad(t, ((0, Bp - B), (0, 0)))

    out = pl.pallas_call(
        scorenet_kernel,
        out_shape=jax.ShapeDtypeStruct((Bp, D), x.dtype),
        grid=(Bp // tb,),
        in_specs=[
            pl.BlockSpec((tb, D), lambda i: (i, 0)),   # x tile: streams
            pl.BlockSpec((tb, 1), lambda i: (i, 0)),   # t tile: streams
            pl.BlockSpec((D, H), lambda i: (0, 0)),    # weights/biases: constant
            pl.BlockSpec((1, H), lambda i: (0, 0)),    #   index_map -> DMA'd once,
            pl.BlockSpec((1, H), lambda i: (0, 0)),    #   stay VMEM-resident
            pl.BlockSpec((H, D), lambda i: (0, 0)),
            pl.BlockSpec((1, D), lambda i: (0, 0)),
        ],
        out_specs=pl.BlockSpec((tb, D), lambda i: (i, 0)),  # real-width output
        compiler_params=pltpu.CompilerParams(
            dimension_semantics=("parallel",)),        # megacore on v7x
    )(x, t, w1x, w1t, b1, w2, b2)

    return out if Bp == B else out[:B]


def scorenet_reference(t, x, params):
    """Pure-JAX reference (raw, unfolded parameters)."""
    w1x, w1t, b1, w2, b2 = params
    h = jnp.maximum(x @ w1x + t * w1t + b1, 0.0)
    return 0.01 * (h @ w2 + b2)


# TODO(synk): ScoreNet.propagate (in-place Euler loop with torch.randn_like) is
# a sampling driver, not forward(); fusing it would need an in-kernel step loop
# with pltpu.prng_* noise and input_output_aliases on x — left host-side.

if __name__ == "__main__":
    B, D, H = 8, 16, 32   # small shapes: batch=8, feature dim=16, hidden=32

    key = jax.random.PRNGKey(0)
    kx, kt, kp = jax.random.split(key, 3)
    x = jax.random.normal(kx, (B, D), jnp.float32)
    t = jax.random.uniform(kt, (B, 1), jnp.float32)

    raw_params = init_params(kp, D, H)
    prepared = prepare_params(raw_params)

    out = scorenet_forward(t, x, prepared)
    out = jax.block_until_ready(out)

    ref = scorenet_reference(t, x, raw_params)
    assert out.shape == (B, D)
    assert jnp.allclose(out, ref, atol=1e-5, rtol=1e-5)

    print("KERNEL_OK")
</pallas_src>

<mosaic_0001>
module attributes {stable_mosaic.version = 11 : i64} {
  func.func @scorenet_kernel(%arg0: i32, %arg1: memref<8x16xf32, #tpu.memory_space<vmem>>, %arg2: memref<8x1xf32, #tpu.memory_space<vmem>>, %arg3: memref<16x32xf32, #tpu.memory_space<vmem>>, %arg4: memref<1x32xf32, #tpu.memory_space<vmem>>, %arg5: memref<1x32xf32, #tpu.memory_space<vmem>>, %arg6: memref<32x16xf32, #tpu.memory_space<vmem>>, %arg7: memref<1x16xf32, #tpu.memory_space<vmem>>, %arg8: memref<8x16xf32, #tpu.memory_space<vmem>>) attributes {dimension_semantics = [#tpu.dimension_semantics<parallel>], iteration_bounds = array<i64: 1>, scalar_prefetch = 0 : i64, scratch_operands = 0 : i64, tpu.core_type = #tpu.core_type<tc>, window_params = [{transform_indices = @transform_0, window_bounds = array<i64: 8, 16>}, {transform_indices = @transform_1, window_bounds = array<i64: 8, 1>}, {pipeline_mode = #tpu.pipeline_mode<synchronous>, transform_indices = @transform_2, window_bounds = array<i64: 16, 32>}, {pipeline_mode = #tpu.pipeline_mode<synchronous>, transform_indices = @transform_3, window_bounds = array<i64: 1, 32>}, {pipeline_mode = #tpu.pipeline_mode<synchronous>, transform_indices = @transform_4, window_bounds = array<i64: 1, 32>}, {pipeline_mode = #tpu.pipeline_mode<synchronous>, transform_indices = @transform_5, window_bounds = array<i64: 32, 16>}, {pipeline_mode = #tpu.pipeline_mode<synchronous>, transform_indices = @transform_6, window_bounds = array<i64: 1, 16>}, {transform_indices = @transform_7, window_bounds = array<i64: 8, 16>}]} {
    %c0 = arith.constant 0 : index
    %c0_0 = arith.constant 0 : index
    %0 = vector.load %arg1[%c0, %c0_0] : memref<8x16xf32, #tpu.memory_space<vmem>>, vector<8x16xf32>
    %c0_1 = arith.constant 0 : index
    %c0_2 = arith.constant 0 : index
    %1 = vector.load %arg3[%c0_1, %c0_2] : memref<16x32xf32, #tpu.memory_space<vmem>>, vector<16x32xf32>
    %cst = arith.constant dense<0.000000e+00> : vector<8x32xf32>
    %2 = tpu.matmul %0, %1, %cst {dimension_numbers = #tpu.dot_dimension_numbers<[1], [0], [0], [1], [0, 0, 1, 1], [], []>} : vector<8x16xf32>, vector<16x32xf32>, vector<8x32xf32> -> vector<8x32xf32>
    %c0_3 = arith.constant 0 : index
    %c0_4 = arith.constant 0 : index
    %3 = vector.load %arg2[%c0_3, %c0_4] : memref<8x1xf32, #tpu.memory_space<vmem>>, vector<8x1xf32>
    %c0_5 = arith.constant 0 : index
    %c0_6 = arith.constant 0 : index
    %4 = vector.load %arg4[%c0_5, %c0_6] : memref<1x32xf32, #tpu.memory_space<vmem>>, vector<1x32xf32>
    %5 = vector.broadcast %3 : vector<8x1xf32> to vector<8x32xf32>
    %6 = vector.broadcast %4 : vector<1x32xf32> to vector<8x32xf32>
    %7 = arith.mulf %5, %6 : vector<8x32xf32>
    %8 = arith.addf %2, %7 : vector<8x32xf32>
    %c0_7 = arith.constant 0 : index
    %c0_8 = arith.constant 0 : index
    %9 = vector.load %arg5[%c0_7, %c0_8] : memref<1x32xf32, #tpu.memory_space<vmem>>, vector<1x32xf32>
    %10 = vector.broadcast %9 : vector<1x32xf32> to vector<8x32xf32>
    %11 = arith.addf %8, %10 : vector<8x32xf32>
    %cst_9 = arith.constant 0.000000e+00 : f32
    %12 = vector.broadcast %cst_9 : f32 to vector<8x32xf32>
    %13 = arith.maximumf %11, %12 : vector<8x32xf32>
    %c0_10 = arith.constant 0 : index
    %c0_11 = arith.constant 0 : index
    %14 = vector.load %arg6[%c0_10, %c0_11] : memref<32x16xf32, #tpu.memory_space<vmem>>, vector<32x16xf32>
    %cst_12 = arith.constant dense<0.000000e+00> : vector<8x16xf32>
    %15 = tpu.matmul %13, %14, %cst_12 {dimension_numbers = #tpu.dot_dimension_numbers<[1], [0], [0], [1], [0, 0, 1, 1], [], []>} : vector<8x32xf32>, vector<32x16xf32>, vector<8x16xf32> -> vector<8x16xf32>
    %c0_13 = arith.constant 0 : index
    %c0_14 = arith.constant 0 : index
    %16 = vector.load %arg7[%c0_13, %c0_14] : memref<1x16xf32, #tpu.memory_space<vmem>>, vector<1x16xf32>
    %17 = vector.broadcast %16 : vector<1x16xf32> to vector<8x16xf32>
    %18 = arith.addf %15, %17 : vector<8x16xf32>
    %c0_15 = arith.constant 0 : index
    %c0_16 = arith.constant 0 : index
    %19 = vector.load %arg8[%c0_15, %c0_16] : memref<8x16xf32, #tpu.memory_space<vmem>>, vector<8x16xf32>
    tpu.vector_store %arg8[%c0_15, %c0_16], %18 {strides = array<i32>} : memref<8x16xf32, #tpu.memory_space<vmem>>, vector<8x16xf32>,
    return
  }
  func.func @transform_0(%arg0: i32) -> (i32, i32) {
    %c0_i32 = arith.constant 0 : i32
    %c0_i32_0 = arith.constant 0 : i32
    return %arg0, %c0_i32 : i32, i32
  }
  func.func @transform_1(%arg0: i32) -> (i32, i32) {
    %c0_i32 = arith.constant 0 : i32
    %c0_i32_0 = arith.constant 0 : i32
    return %arg0, %c0_i32 : i32, i32
  }
  func.func @transform_2(%arg0: i32) -> (i32, i32) {
    %c0_i32 = arith.constant 0 : i32
    %c0_i32_0 = arith.constant 0 : i32
    %c0_i32_1 = arith.constant 0 : i32
    return %c0_i32, %c0_i32_0 : i32, i32
  }
  func.func @transform_3(%arg0: i32) -> (i32, i32) {
    %c0_i32 = arith.constant 0 : i32
    %c0_i32_0 = arith.constant 0 : i32
    %c0_i32_1 = arith.constant 0 : i32
    return %c0_i32, %c0_i32_0 : i32, i32
  }
  func.func @transform_4(%arg0: i32) -> (i32, i32) {
    %c0_i32 = arith.constant 0 : i32
    %c0_i32_0 = arith.constant 0 : i32
    %c0_i32_1 = arith.constant 0 : i32
    return %c0_i32, %c0_i32_0 : i32, i32
  }
  func.func @transform_5(%arg0: i32) -> (i32, i32) {
    %c0_i32 = arith.constant 0 : i32
    %c0_i32_0 = arith.constant 0 : i32
    %c0_i32_1 = arith.constant 0 : i32
    return %c0_i32, %c0_i32_0 : i32, i32
  }
  func.func @transform_6(%arg0: i32) -> (i32, i32) {
    %c0_i32 = arith.constant 0 : i32
    %c0_i32_0 = arith.constant 0 : i32
    %c0_i32_1 = arith.constant 0 : i32
    return %c0_i32, %c0_i32_0 : i32, i32
  }
  func.func @transform_7(%arg0: i32) -> (i32, i32) {
    %c0_i32 = arith.constant 0 : i32
    %c0_i32_0 = arith.constant 0 : i32
    return %arg0, %c0_i32 : i32, i32
  }
}

</mosaic_0001>

<llo_original>
// kernel: tpu_custom_call.1
$region0: #{tpu_custom_call.1}
  #allocation0 [shape = 'u32[]', space=smem, size = 0x4, offset = 0x4, fixed_abs, tag = 'smem constant byte address 0x4 - core index']
  #allocation1 [shape = 'u32[144,128]{1,0:T(1,128)}', space=vmem, size = 0x12000, scoped, tag = 'internal scratch']
  %s0 = inlined_call_operand.vmem [shape: f32[8,16], index: 0, kind: input, shape index: {}]
  %s1 = inlined_call_operand.vmem [shape: f32[8,1], index: 1, kind: input, shape index: {}]
  %s2 = inlined_call_operand.vmem [shape: f32[16,32], index: 2, kind: input, shape index: {}]
  %s3 = inlined_call_operand.vmem [shape: f32[1,32], index: 3, kind: input, shape index: {}]
  %s4 = inlined_call_operand.vmem [shape: f32[1,32], index: 4, kind: input, shape index: {}]
  %s5 = inlined_call_operand.vmem [shape: f32[32,16], index: 5, kind: input, shape index: {}]
  %s6 = inlined_call_operand.vmem [shape: f32[1,16], index: 6, kind: input, shape index: {}]
  %s7 = inlined_call_operand.hbm [shape: f32[8,16], index: 7, kind: output, shape index: {}]
  %s8 = sld [smem:[#allocation0]]
  $region38: #{tpu_custom_call.1} parent=0
    _
  %s10 = ssub.s32 1, %s8
  %s11 = scalar_select 0, %s10, %s8
  $region1: #{tpu_custom_call.1} parent=0
    #allocation2 [shape = 'u8[4096]{0}', space=vmem, size = 0x1000, scoped, tag = 'output window, operand 0, single buffered']
    #allocation3 [shape = 's32[1]{0}', space=sflag, size = 0x4, scoped, tag = 'scoped memory for tpu_custom_call.1']
    %12 = vsyncpa [#allocation3], 0
    // Predicated region
    $region2: #{tpu_custom_call.1} parent=1 // pred_check
      _
    $region3: #{tpu_custom_call.1} parent=1 // pred_check_branch
      %14 = sbr.rel (0) target = $region5
    $region4: #{tpu_custom_call.1} parent=1 // pred_region
      _
    $region5: #{tpu_custom_call.1} parent=1 // pred_fallthru
      _
    // Predicated region
    $region6: #{tpu_custom_call.1} parent=1 // pred_check
      _
    $region7: #{tpu_custom_call.1} parent=1 // pred_check_branch
      %16 = sbr.rel (0) target = $region9
    $region8: #{tpu_custom_call.1} parent=1 // pred_region
      _
    $region9: #{tpu_custom_call.1} parent=1 // pred_fallthru
      _
    // Predicated region
    $region10: #{tpu_custom_call.1} parent=1 // pred_check
      _
    $region11: #{tpu_custom_call.1} parent=1 // pred_check_branch
      %18 = sbr.rel (0) target = $region13
    $region12: #{tpu_custom_call.1} parent=1 // pred_region
      _
    $region13: #{tpu_custom_call.1} parent=1 // pred_fallthru
      _
    // Predicated region
    $region14: #{tpu_custom_call.1} parent=1 // pred_check
      _
    $region15: #{tpu_custom_call.1} parent=1 // pred_check_branch
      %20 = sbr.rel (0) target = $region17
    $region16: #{tpu_custom_call.1} parent=1 // pred_region
      _
    $region17: #{tpu_custom_call.1} parent=1 // pred_fallthru
      _
    // Predicated region
    $region18: #{tpu_custom_call.1} parent=1 // pred_check
      _
    $region19: #{tpu_custom_call.1} parent=1 // pred_check_branch
      %22 = sbr.rel (0) target = $region21
    $region20: #{tpu_custom_call.1} parent=1 // pred_region
      _
    $region21: #{tpu_custom_call.1} parent=1 // pred_fallthru
      _
    // Predicated region
    $region22: #{tpu_custom_call.1} parent=1 // pred_check
      _
    $region23: #{tpu_custom_call.1} parent=1 // pred_check_branch
      %24 = sbr.rel (0) target = $region25
    $region24: #{tpu_custom_call.1} parent=1 // pred_region
      _
    $region25: #{tpu_custom_call.1} parent=1 // pred_fallthru
      _
    // Predicated region
    $region26: #{tpu_custom_call.1} parent=1 // pred_check
      _
    $region27: #{tpu_custom_call.1} parent=1 // pred_check_branch
      %26 = sbr.rel (0) target = $region29
    $region28: #{tpu_custom_call.1} parent=1 // pred_region
      _
    $region29: #{tpu_custom_call.1} parent=1 // pred_fallthru
      _
    %v27 = vld [vmem:[%s0] sm:$0xff]
    %v28 = vld [vmem:[%s2] sm:$0xff]
    %v29 = vld [vmem:[%s2 + $0x8] sm:$0xff]
    %v30 = vld [vmem:[%s1] sm:$0xff]
    %v31 = vld [vmem:[%s3] sm:$0x1]
    %33 = vset.pattern.permute.xlu0 0
    %34 = vperm.xlu0 %33, %v30
    %v35 = vpop.permute.xlu0 %34
    %v38 = vlaneseq
    %v39 = vshrl.u32 %v38, 7
    %v40 = vsub.s32 0, %v39
    %v41 = vrot.slane %v31, %v40
    %v43 = vmul.f32 %v35, %v41
    %vm44 = vcmask 130048
    %v46 = vsel %vm44, %v27, 0
    %48 = vmatprep.subr.mxu0 0.0
    %49 = vmatpush1.msra.mxu0 0.0
    %50 = vmatprep.subr.mxu0 0.0
    %51 = vmatpush1.msra.mxu0 0.0
    %52 = vmatprep.subr.mxu0 0.0
    %53 = vmatpush1.msra.mxu0 0.0
    %54 = vmatprep.subr.mxu0 0.0
    %55 = vmatpush1.msra.mxu0 0.0
    %56 = vmatprep.subr.mxu0 0.0
    %57 = vmatpush1.msra.mxu0 0.0
    %58 = vmatprep.subr.mxu0 0.0
    %59 = vmatpush1.msra.mxu0 0.0
    %60 = vmatprep.subr.mxu0 0.0
    %61 = vmatpush1.msra.mxu0 0.0
    %62 = vmatprep.subr.mxu0 0.0
    %63 = vmatpush1.msra.mxu0 0.0
    %64 = vmatprep.subr.mxu0 0.0
    %65 = vmatpush1.msra.mxu0 0.0
    %66 = vmatprep.subr.mxu0 0.0
    %67 = vmatpush1.msra.mxu0 0.0
    %68 = vmatprep.subr.mxu0 0.0
    %69 = vmatpush1.msra.mxu0 0.0
    %70 = vmatprep.subr.mxu0 0.0
    %71 = vmatpush1.msra.mxu0 0.0
    %72 = vmatprep.subr.mxu0 0.0
    %73 = vmatpush1.msra.mxu0 0.0
    %74 = vmatprep.subr.mxu0 0.0
    %75 = vmatpush1.msra.mxu0 0.0
    %76 = vmatprep.subr.mxu0 0.0
    %77 = vmatpush1.msra.mxu0 %v29
    %78 = vmatprep.subr.mxu0 0.0
    %79 = vmatpush1.msra.mxu0 %v28
    %80 = vmatprep.subr.mxu0 0.0
    %81 = vmatpush2.msra.mxu0 0.0
    %82 = vmatprep.subr.mxu0 0.0
    %83 = vmatpush2.msra.mxu0 0.0
    %84 = vmatprep.subr.mxu0 0.0
    %85 = vmatpush2.msra.mxu0 0.0
    %86 = vmatprep.subr.mxu0 0.0
    %87 = vmatpush2.msra.mxu0 0.0
    %88 = vmatprep.subr.mxu0 0.0
    %89 = vmatpush2.msra.mxu0 0.0
    %90 = vmatprep.subr.mxu0 0.0
    %91 = vmatpush2.msra.mxu0 0.0
    %92 = vmatprep.subr.mxu0 0.0
    %93 = vmatpush2.msra.mxu0 0.0
    %94 = vmatprep.subr.mxu0 0.0
    %95 = vmatpush2.msra.mxu0 0.0
    %96 = vmatprep.subr.mxu0 0.0
    %97 = vmatpush2.msra.mxu0 0.0
    %98 = vmatprep.subr.mxu0 0.0
    %99 = vmatpush2.msra.mxu0 0.0
    %100 = vmatprep.subr.mxu0 0.0
    %101 = vmatpush2.msra.mxu0 0.0
    %102 = vmatprep.subr.mxu0 0.0
    %103 = vmatpush2.msra.mxu0 0.0
    %104 = vmatprep.subr.mxu0 0.0
    %105 = vmatpush2.msra.mxu0 0.0
    %106 = vmatprep.subr.mxu0 0.0
    %107 = vmatpush2.msra.mxu0 0.0
    %108 = vmatprep.subr.mxu0 0.0
    %109 = vmatpush2.msra.mxu0 0.0
    %110 = vmatprep.subr.mxu0 0.0
    %111 = vmatpush2.msra.mxu0 0.0
    %112 = vmatprep.mubr.f32.mxu0 0.0
    %113 = vmatmul.mubr.f32.gmra.mxu0 %v46
    %v114 = vpop.f32.mrf.mxu0
    %v115 = vadd.f32 %v43, %v114
    %v116 = vpop.f32.mrf.mxu0
    %117 = vdwg.mxu0
    %v118 = vld [vmem:[%s4] sm:$0x1]
    %v120 = vlaneseq
    %v121 = vshrl.u32 %v120, 7
    %v122 = vsub.s32 0, %v121
    %v123 = vrot.slane %v118, %v122
    %v125 = vadd.f32 %v115, %v123
    %v126 = vmax.f32 %v125, 0.0
    %v127 = vld [vmem:[%s5] sm:$0xff]
    %v128 = vld [vmem:[%s5 + $0x8] sm:$0xff]
    %v129 = vld [vmem:[%s5 + $0x10] sm:$0xff]
    %v130 = vld [vmem:[%s5 + $0x18] sm:$0xff]
    %v131 = vld [vmem:[%s6] sm:$0x1]
    %v133 = vlaneseq
    %v134 = vshrl.u32 %v133, 7
    %v135 = vsub.s32 0, %v134
    %v136 = vrot.slane %v131, %v135
    %vm138 = vcmask 261120
    %v140 = vsel %vm138, %v126, 0
    %142 = vmatprep.subr.mxu0 0.0
    %143 = vmatpush1.msra.mxu0 0.0
    %144 = vmatprep.subr.mxu0 0.0
    %145 = vmatpush1.msra.mxu0 0.0
    %146 = vmatprep.subr.mxu0 0.0
    %147 = vmatpush1.msra.mxu0 0.0
    %148 = vmatprep.subr.mxu0 0.0
    %149 = vmatpush1.msra.mxu0 0.0
    %150 = vmatprep.subr.mxu0 0.0
    %151 = vmatpush1.msra.mxu0 0.0
    %152 = vmatprep.subr.mxu0 0.0
    %153 = vmatpush1.msra.mxu0 0.0
    %154 = vmatprep.subr.mxu0 0.0
    %155 = vmatpush1.msra.mxu0 0.0
    %156 = vmatprep.subr.mxu0 0.0
    %157 = vmatpush1.msra.mxu0 0.0
    %158 = vmatprep.subr.mxu0 0.0
    %159 = vmatpush1.msra.mxu0 0.0
    %160 = vmatprep.subr.mxu0 0.0
    %161 = vmatpush1.msra.mxu0 0.0
    %162 = vmatprep.subr.mxu0 0.0
    %163 = vmatpush1.msra.mxu0 0.0
    %164 = vmatprep.subr.mxu0 0.0
    %165 = vmatpush1.msra.mxu0 0.0
    %166 = vmatprep.subr.mxu0 0.0
    %167 = vmatpush1.msra.mxu0 %v130
    %168 = vmatprep.subr.mxu0 0.0
    %169 = vmatpush1.msra.mxu0 %v129
    %170 = vmatprep.subr.mxu0 0.0
    %171 = vmatpush1.msra.mxu0 %v128
    %172 = vmatprep.subr.mxu0 0.0
    %173 = vmatpush1.msra.mxu0 %v127
    %174 = vmatprep.subr.mxu0 0.0
    %175 = vmatpush2.msra.mxu0 0.0
    %176 = vmatprep.subr.mxu0 0.0
    %177 = vmatpush2.msra.mxu0 0.0
    %178 = vmatprep.subr.mxu0 0.0
    %179 = vmatpush2.msra.mxu0 0.0
    %180 = vmatprep.subr.mxu0 0.0
    %181 = vmatpush2.msra.mxu0 0.0
    %182 = vmatprep.subr.mxu0 0.0
    %183 = vmatpush2.msra.mxu0 0.0
    %184 = vmatprep.subr.mxu0 0.0
    %185 = vmatpush2.msra.mxu0 0.0
    %186 = vmatprep.subr.mxu0 0.0
    %187 = vmatpush2.msra.mxu0 0.0
    %188 = vmatprep.subr.mxu0 0.0
    %189 = vmatpush2.msra.mxu0 0.0
    %190 = vmatprep.subr.mxu0 0.0
    %191 = vmatpush2.msra.mxu0 0.0
    %192 = vmatprep.subr.mxu0 0.0
    %193 = vmatpush2.msra.mxu0 0.0
    %194 = vmatprep.subr.mxu0 0.0
    %195 = vmatpush2.msra.mxu0 0.0
    %196 = vmatprep.subr.mxu0 0.0
    %197 = vmatpush2.msra.mxu0 0.0
    %198 = vmatprep.subr.mxu0 0.0
    %199 = vmatpush2.msra.mxu0 0.0
    %200 = vmatprep.subr.mxu0 0.0
    %201 = vmatpush2.msra.mxu0 0.0
    %202 = vmatprep.subr.mxu0 0.0
    %203 = vmatpush2.msra.mxu0 0.0
    %204 = vmatprep.subr.mxu0 0.0
    %205 = vmatpush2.msra.mxu0 0.0
    %206 = vmatprep.mubr.f32.mxu0 0.0
    %207 = vmatmul.mubr.f32.gmra.mxu0 %v140
    %v208 = vpop.f32.mrf.mxu0
    %v209 = vadd.f32 %v136, %v208
    %v210 = vpop.f32.mrf.mxu0
    %211 = vdwg.mxu0
    %212 = vst.msk [vmem:[#allocation2] sm:$0xff] %vm44, %v209
    // Predicated region
    $region30: #{tpu_custom_call.1} parent=1 // pred_check
      _
    $region31: #{tpu_custom_call.1} parent=1 // pred_check_branch
      %214 = sbr.rel (0) target = $region33
    $region32: #{tpu_custom_call.1} parent=1 // pred_region
      %s216 = ssub.s32 128, 128
      %217 = vsyncadd [#allocation3], %s216
      %s219 = sshll.u32 [#allocation2], 4
      %s220 = int_to_ptr.vmem [resolvable:$true] %s219
      %222 = dma.vmem_to_hbm [thread:$0]  %s220, 128, %s7, [#allocation3]
    $region33: #{tpu_custom_call.1} parent=1 // pred_fallthru
      _
    // Predicated region
    $region34: #{tpu_custom_call.1} parent=1 // pred_check
      _
    $region35: #{tpu_custom_call.1} parent=1 // pred_check_branch
      %224 = sbr.rel (0) target = $region37
    $region36: #{tpu_custom_call.1} parent=1 // pred_region
      %225 = dma.done [#allocation3], 128
    $region37: #{tpu_custom_call.1} parent=1 // pred_fallthru
      _
    %226 = vsyncpa [#allocation3], 1

</llo_original>
